<compile_context>
chip_gen: v7x
topology: tpu7x:2x2x1
jax: 0.10.0
libtpu: 0.0.40
codegen_flags: <defaults>
</compile_context>

<pallas_src>
import jax
import jax.numpy as jnp
from jax.experimental import pallas as pl
from jax.experimental.pallas import tpu as pltpu


def _conv_stats_kernel(a_ref, w_ref, y_ref, psum_ref, pssq_ref):
    """One M-tile: conv-as-matmul (MXU, bf16 in / f32 acc) + per-tile BN partial stats."""
    y = jnp.dot(a_ref[...], w_ref[...], preferred_element_type=jnp.float32)
    y_ref[...] = y
    # Padded rows of A are exactly zero (no bias add), so they contribute 0 to the
    # statistics -> no row masking needed.  Partial sums go to per-tile blocks so the
    # M grid axis stays "parallel".
    psum_ref[...] = jnp.sum(y, axis=0, keepdims=True)[None]
    pssq_ref[...] = jnp.sum(y * y, axis=0, keepdims=True)[None]


def _bn_relu_kernel(y_ref, scale_ref, shift_ref, o_ref):
    o_ref[...] = jnp.maximum(y_ref[...] * scale_ref[...] + shift_ref[...], 0.0)


def conv_bn_relu(x, weight, bias, gamma, beta, *, stride=1, padding=0, eps=1e-3, tm=512):
    """x: [N, Cin, H, W] (NCHW) float32.  Returns [N, Cout, Ho, Wo] (NCHW) float32.

    `bias` is accepted for nn.Conv2d API parity but is mathematically a no-op under
    training-mode BatchNorm (it only shifts the per-channel mean, which BN removes),
    so it is dropped from the kernel entirely (also avoids mean/variance cancellation).
    """
    del bias
    N, Cin, H, W = x.shape
    Cout, _, kh, kw = weight.shape

    if padding:
        x = jnp.pad(x, ((0, 0), (0, 0), (padding, padding), (padding, padding)))
    Hp, Wp = x.shape[2], x.shape[3]
    Ho = (Hp - kh) // stride + 1
    Wo = (Wp - kw) // stride + 1

    # im2col glue (plain JAX).
    # TODO(synk): fold im2col into the kernel (NHWC layout + kh*kw grid axis with
    # shifted-window index_maps) to cut activation HBM reads by ~kh*kw.
    cols = []
    for di in range(kh):
        for dj in range(kw):
            cols.append(x[:, :, di:di + stride * Ho:stride, dj:dj + stride * Wo:stride])
    patches = jnp.stack(cols, axis=2)                               # [N, Cin, kh*kw, Ho, Wo]
    A = patches.transpose(0, 3, 4, 1, 2).reshape(N * Ho * Wo, Cin * kh * kw)

    K = Cin * kh * kw
    M = N * Ho * Wo
    Mp = pl.cdiv(M, tm) * tm
    Coutp = pl.cdiv(Cout, 128) * 128                                # lane-dense channel dim

    # bf16 matmul operands (f32 accumulation in-kernel); pad M rows and Cout lanes.
    A = jnp.pad(A, ((0, Mp - M), (0, 0))).astype(jnp.bfloat16)
    Wm = jnp.pad(weight.reshape(Cout, K).T,
                 ((0, 0), (0, Coutp - Cout))).astype(jnp.bfloat16)  # [K, Coutp]

    grid_m = Mp // tm
    cparams = pltpu.CompilerParams(
        dimension_semantics=("parallel",),       # no resident accumulator -> fully parallel
        vmem_limit_bytes=32 * 1024 * 1024)       # safe on v5e/v6e/v7x; re-derive for big layers

    y, psum, pssq = pl.pallas_call(
        _conv_stats_kernel,
        out_shape=(jax.ShapeDtypeStruct((Mp, Coutp), jnp.float32),
                   jax.ShapeDtypeStruct((grid_m, 1, Coutp), jnp.float32),
                   jax.ShapeDtypeStruct((grid_m, 1, Coutp), jnp.float32)),
        grid_spec=pltpu.PrefetchScalarGridSpec(
            num_scalar_prefetch=0,
            grid=(grid_m,),
            in_specs=[pl.BlockSpec((tm, K), lambda i: (i, 0)),
                      pl.BlockSpec((K, Coutp), lambda i: (0, 0))],
            out_specs=(pl.BlockSpec((tm, Coutp), lambda i: (i, 0)),
                       pl.BlockSpec((1, 1, Coutp), lambda i: (i, 0, 0)),
                       pl.BlockSpec((1, 1, Coutp), lambda i: (i, 0, 0)))),
        compiler_params=cparams,
    )(A, Wm)

    # Fold batch statistics into a per-channel affine (tiny scalar glue, f32).
    s = jnp.sum(psum, axis=0)                                       # (1, Coutp)
    q = jnp.sum(pssq, axis=0)
    mean = s / M
    var = jnp.maximum(q / M - mean * mean, 0.0)                     # biased var (training BN)
    rstd = jax.lax.rsqrt(var + eps)
    gamma_p = jnp.pad(gamma.astype(jnp.float32), (0, Coutp - Cout)).reshape(1, Coutp)
    beta_p = jnp.pad(beta.astype(jnp.float32), (0, Coutp - Cout)).reshape(1, Coutp)
    scale = gamma_p * rstd
    shift = beta_p - mean * scale

    out = pl.pallas_call(
        _bn_relu_kernel,
        out_shape=jax.ShapeDtypeStruct((Mp, Coutp), jnp.float32),
        grid_spec=pltpu.PrefetchScalarGridSpec(
            num_scalar_prefetch=0,
            grid=(grid_m,),
            in_specs=[pl.BlockSpec((tm, Coutp), lambda i: (i, 0)),
                      pl.BlockSpec((1, Coutp), lambda i: (0, 0)),
                      pl.BlockSpec((1, Coutp), lambda i: (0, 0))],
            out_specs=pl.BlockSpec((tm, Coutp), lambda i: (i, 0))),
        input_output_aliases={0: 0},             # normalize y in place (saves an HBM buffer)
        compiler_params=cparams,
    )(y, scale, shift)

    # TODO(synk): return NHWC (skip this transpose) if the downstream consumer allows it.
    return out[:M, :Cout].reshape(N, Ho, Wo, Cout).transpose(0, 3, 1, 2)


if __name__ == "__main__":
    key = jax.random.PRNGKey(0)
    k1, k2, k3 = jax.random.split(key, 3)

    N, Cin, H, W = 2, 4, 16, 16
    Cout, ksz = 8, 3
    eps = 1e-3

    x = jax.random.normal(k1, (N, Cin, H, W), jnp.float32)
    weight = jax.random.normal(k2, (Cout, Cin, ksz, ksz), jnp.float32) * 0.1
    bias = jax.random.normal(k3, (Cout,), jnp.float32) * 0.1
    gamma = jnp.ones((Cout,), jnp.float32)    # BatchNorm2d default init
    beta = jnp.zeros((Cout,), jnp.float32)

    # Pure-JAX reference with the same bf16 conv operands (f32 accumulation):
    # conv + bias -> training-mode BN -> ReLU.  The reference keeps the bias; the
    # kernel drops it (it cancels exactly under BN), so this also checks that claim.
    y_ref = jax.lax.conv_general_dilated(
        x.astype(jnp.bfloat16), weight.astype(jnp.bfloat16), (1, 1), "VALID",
        dimension_numbers=("NCHW", "OIHW", "NCHW"),
        preferred_element_type=jnp.float32) + bias.reshape(1, Cout, 1, 1)
    mu = y_ref.mean(axis=(0, 2, 3), keepdims=True)
    var = y_ref.var(axis=(0, 2, 3), keepdims=True)
    ref = jnp.maximum(
        (y_ref - mu) * jax.lax.rsqrt(var + eps) * gamma.reshape(1, Cout, 1, 1)
        + beta.reshape(1, Cout, 1, 1), 0.0)

    for tm in (512, 128):     # single-tile and multi-tile M grids
        out = conv_bn_relu(x, weight, bias, gamma, beta,
                           stride=1, padding=0, eps=eps, tm=tm)
        out = jax.block_until_ready(out)
        assert out.shape == ref.shape == (N, Cout, H - ksz + 1, W - ksz + 1)
        err = float(jnp.max(jnp.abs(out - ref)))
        assert jnp.allclose(out, ref, atol=2e-3, rtol=2e-3), err

    print("KERNEL_OK")
</pallas_src>

<mosaic_0001>
module attributes {stable_mosaic.version = 11 : i64} {
  func.func @_conv_stats_kernel(%arg0: i32, %arg1: memref<512x36xbf16, #tpu.memory_space<vmem>>, %arg2: memref<36x128xbf16, #tpu.memory_space<vmem>>, %arg3: memref<512x128xf32, #tpu.memory_space<vmem>>, %arg4: memref<1x1x128xf32, #tpu.memory_space<vmem>>, %arg5: memref<1x1x128xf32, #tpu.memory_space<vmem>>) attributes {dimension_semantics = [#tpu.dimension_semantics<parallel>], iteration_bounds = array<i64: 1>, scalar_prefetch = 0 : i64, scratch_operands = 0 : i64, tpu.core_type = #tpu.core_type<tc>, window_params = [{transform_indices = @transform_0, window_bounds = array<i64: 512, 36>}, {pipeline_mode = #tpu.pipeline_mode<synchronous>, transform_indices = @transform_1, window_bounds = array<i64: 36, 128>}, {transform_indices = @transform_2, window_bounds = array<i64: 512, 128>}, {transform_indices = @transform_3, window_bounds = array<i64: 1, 1, 128>}, {transform_indices = @transform_4, window_bounds = array<i64: 1, 1, 128>}]} {
    %c0 = arith.constant 0 : index
    %c0_0 = arith.constant 0 : index
    %0 = vector.load %arg1[%c0, %c0_0] : memref<512x36xbf16, #tpu.memory_space<vmem>>, vector<512x36xbf16>
    %c0_1 = arith.constant 0 : index
    %c0_2 = arith.constant 0 : index
    %1 = vector.load %arg2[%c0_1, %c0_2] : memref<36x128xbf16, #tpu.memory_space<vmem>>, vector<36x128xbf16>
    %cst = arith.constant dense<0.000000e+00> : vector<512x128xf32>
    %2 = tpu.matmul %0, %1, %cst {dimension_numbers = #tpu.dot_dimension_numbers<[1], [0], [0], [1], [0, 0, 1, 1], [], []>} : vector<512x36xbf16>, vector<36x128xbf16>, vector<512x128xf32> -> vector<512x128xf32>
    %c0_3 = arith.constant 0 : index
    %c0_4 = arith.constant 0 : index
    %3 = vector.load %arg3[%c0_3, %c0_4] : memref<512x128xf32, #tpu.memory_space<vmem>>, vector<512x128xf32>
    tpu.vector_store %arg3[%c0_3, %c0_4], %2 {strides = array<i32>} : memref<512x128xf32, #tpu.memory_space<vmem>>, vector<512x128xf32>,
    %cst_5 = arith.constant dense<0.000000e+00> : vector<128xf32>
    %4 = vector.multi_reduction <add>, %2, %cst_5 [0] : vector<512x128xf32> to vector<128xf32>
    %5 = vector.shape_cast %4 : vector<128xf32> to vector<1x128xf32>
    %6 = vector.shape_cast %5 : vector<1x128xf32> to vector<1x1x128xf32>
    %c0_6 = arith.constant 0 : index
    %c0_7 = arith.constant 0 : index
    %c0_8 = arith.constant 0 : index
    %7 = vector.load %arg4[%c0_6, %c0_7, %c0_8] : memref<1x1x128xf32, #tpu.memory_space<vmem>>, vector<1x1x128xf32>
    tpu.vector_store %arg4[%c0_6, %c0_7, %c0_8], %6 {strides = array<i32>} : memref<1x1x128xf32, #tpu.memory_space<vmem>>, vector<1x1x128xf32>,
    %8 = arith.mulf %2, %2 : vector<512x128xf32>
    %cst_9 = arith.constant dense<0.000000e+00> : vector<128xf32>
    %9 = vector.multi_reduction <add>, %8, %cst_9 [0] : vector<512x128xf32> to vector<128xf32>
    %10 = vector.shape_cast %9 : vector<128xf32> to vector<1x128xf32>
    %11 = vector.shape_cast %10 : vector<1x128xf32> to vector<1x1x128xf32>
    %c0_10 = arith.constant 0 : index
    %c0_11 = arith.constant 0 : index
    %c0_12 = arith.constant 0 : index
    %12 = vector.load %arg5[%c0_10, %c0_11, %c0_12] : memref<1x1x128xf32, #tpu.memory_space<vmem>>, vector<1x1x128xf32>
    tpu.vector_store %arg5[%c0_10, %c0_11, %c0_12], %11 {strides = array<i32>} : memref<1x1x128xf32, #tpu.memory_space<vmem>>, vector<1x1x128xf32>,
    return
  }
  func.func @transform_0(%arg0: i32) -> (i32, i32) {
    %c0_i32 = arith.constant 0 : i32
    %c0_i32_0 = arith.constant 0 : i32
    return %arg0, %c0_i32 : i32, i32
  }
  func.func @transform_1(%arg0: i32) -> (i32, i32) {
    %c0_i32 = arith.constant 0 : i32
    %c0_i32_0 = arith.constant 0 : i32
    %c0_i32_1 = arith.constant 0 : i32
    return %c0_i32, %c0_i32_0 : i32, i32
  }
  func.func @transform_2(%arg0: i32) -> (i32, i32) {
    %c0_i32 = arith.constant 0 : i32
    %c0_i32_0 = arith.constant 0 : i32
    return %arg0, %c0_i32 : i32, i32
  }
  func.func @transform_3(%arg0: i32) -> (i32, i32, i32) {
    %c0_i32 = arith.constant 0 : i32
    %c0_i32_0 = arith.constant 0 : i32
    %c0_i32_1 = arith.constant 0 : i32
    return %arg0, %c0_i32, %c0_i32_0 : i32, i32, i32
  }
  func.func @transform_4(%arg0: i32) -> (i32, i32, i32) {
    %c0_i32 = arith.constant 0 : i32
    %c0_i32_0 = arith.constant 0 : i32
    %c0_i32_1 = arith.constant 0 : i32
    return %arg0, %c0_i32, %c0_i32_0 : i32, i32, i32
  }
}

</mosaic_0001>

<llo_original>
// kernel: tpu_custom_call.1
$region0: #{tpu_custom_call.1}
  #allocation0 [shape = 'u32[]', space=smem, size = 0x4, offset = 0x4, fixed_abs, tag = 'smem constant byte address 0x4 - core index']
  #allocation1 [shape = 'u32[144,128]{1,0:T(1,128)}', space=vmem, size = 0x12000, scoped, tag = 'internal scratch']
  %s0 = inlined_call_operand.vmem [shape: bf16[512,36], index: 0, kind: input, shape index: {}]
  %s1 = inlined_call_operand.vmem [shape: bf16[36,128], index: 1, kind: input, shape index: {}]
  %s2 = inlined_call_operand.hbm [shape: f32[512,128], index: 2, kind: output, shape index: {0}]
  %s3 = inlined_call_operand.hbm [shape: f32[1,1,128], index: 3, kind: output, shape index: {1}]
  %s4 = inlined_call_operand.hbm [shape: f32[1,1,128], index: 4, kind: output, shape index: {2}]
  %5 = xla_tuple %s2, %s3, %s4
  %s6 = sld [smem:[#allocation0]]
  $region34: #{tpu_custom_call.1} parent=0
    _
  %s8 = ssub.s32 1, %s6
  %s9 = scalar_select 0, %s8, %s6
  $region1: #{tpu_custom_call.1} parent=0
    #allocation2 [shape = 'u8[262144]{0}', space=vmem, size = 0x40000, scoped, tag = 'output window, operand 0, single buffered']
    #allocation3 [shape = 's32[1]{0}', space=sflag, size = 0x4, scoped, tag = 'scoped memory for tpu_custom_call.1']
    #allocation4 [shape = 'u8[512]{0}', space=vmem, size = 0x400, scoped, tag = 'output window, operand 1, single buffered']
    #allocation5 [shape = 's32[1]{0}', space=sflag, size = 0x4, scoped, tag = 'scoped memory for tpu_custom_call.1']
    #allocation6 [shape = 'u8[512]{0}', space=vmem, size = 0x400, scoped, tag = 'output window, operand 2, single buffered']
    %10 = vsyncpa [#allocation3], 0
    %11 = vsyncpa [#allocation5], 0
    // Predicated region
    $region2: #{tpu_custom_call.1} parent=1 // pred_check
      _
    $region3: #{tpu_custom_call.1} parent=1 // pred_check_branch
      %13 = sbr.rel (0) target = $region5
    $region4: #{tpu_custom_call.1} parent=1 // pred_region
      _
    $region5: #{tpu_custom_call.1} parent=1 // pred_fallthru
      _
    // Predicated region
    $region6: #{tpu_custom_call.1} parent=1 // pred_check
      _
    $region7: #{tpu_custom_call.1} parent=1 // pred_check_branch
      %15 = sbr.rel (0) target = $region9
    $region8: #{tpu_custom_call.1} parent=1 // pred_region
      _
    $region9: #{tpu_custom_call.1} parent=1 // pred_fallthru
      _
    %v17 = vld [vmem:[%s0] sm:$0xf]
    %v18 = vld [vmem:[%s0 + $0x4] sm:$0xf]
    %v19 = vld [vmem:[%s0 + $0x8] sm:$0xf]
    %v20 = vld [vmem:[%s0 + $0xc] sm:$0xf]
    %v21 = vld [vmem:[%s0 + $0x10] sm:$0xf]
    %v22 = vld [vmem:[%s0 + $0x14] sm:$0xf]
    %v23 = vld [vmem:[%s0 + $0x18] sm:$0xf]
    %v24 = vld [vmem:[%s0 + $0x1c] sm:$0xf]
    %v25 = vld [vmem:[%s0 + $0x20] sm:$0xf]
    %v26 = vld [vmem:[%s0 + $0x24] sm:$0xf]
    %v27 = vld [vmem:[%s0 + $0x28] sm:$0xf]
    %v28 = vld [vmem:[%s0 + $0x2c] sm:$0xf]
    %v29 = vld [vmem:[%s0 + $0x30] sm:$0xf]
    %v30 = vld [vmem:[%s0 + $0x34] sm:$0xf]
    %v31 = vld [vmem:[%s0 + $0x38] sm:$0xf]
    %v32 = vld [vmem:[%s0 + $0x3c] sm:$0xf]
    %v33 = vld [vmem:[%s0 + $0x40] sm:$0xf]
    %v34 = vld [vmem:[%s0 + $0x44] sm:$0xf]
    %v35 = vld [vmem:[%s0 + $0x48] sm:$0xf]
    %v36 = vld [vmem:[%s0 + $0x4c] sm:$0xf]
    %v37 = vld [vmem:[%s0 + $0x50] sm:$0xf]
    %v38 = vld [vmem:[%s0 + $0x54] sm:$0xf]
    %v39 = vld [vmem:[%s0 + $0x58] sm:$0xf]
    %v40 = vld [vmem:[%s0 + $0x5c] sm:$0xf]
    %v41 = vld [vmem:[%s0 + $0x60] sm:$0xf]
    %v42 = vld [vmem:[%s0 + $0x64] sm:$0xf]
    %v43 = vld [vmem:[%s0 + $0x68] sm:$0xf]
    %v44 = vld [vmem:[%s0 + $0x6c] sm:$0xf]
    %v45 = vld [vmem:[%s0 + $0x70] sm:$0xf]
    %v46 = vld [vmem:[%s0 + $0x74] sm:$0xf]
    %v47 = vld [vmem:[%s0 + $0x78] sm:$0xf]
    %v48 = vld [vmem:[%s0 + $0x7c] sm:$0xf]
    %v49 = vld [vmem:[%s0 + $0x80] sm:$0xf]
    %v50 = vld [vmem:[%s0 + $0x84] sm:$0xf]
    %v51 = vld [vmem:[%s0 + $0x88] sm:$0xf]
    %v52 = vld [vmem:[%s0 + $0x8c] sm:$0xf]
    %v53 = vld [vmem:[%s0 + $0x90] sm:$0xf]
    %v54 = vld [vmem:[%s0 + $0x94] sm:$0xf]
    %v55 = vld [vmem:[%s0 + $0x98] sm:$0xf]
    %v56 = vld [vmem:[%s0 + $0x9c] sm:$0xf]
    %v57 = vld [vmem:[%s0 + $0xa0] sm:$0xf]
    %v58 = vld [vmem:[%s0 + $0xa4] sm:$0xf]
    %v59 = vld [vmem:[%s0 + $0xa8] sm:$0xf]
    %v60 = vld [vmem:[%s0 + $0xac] sm:$0xf]
    %v61 = vld [vmem:[%s0 + $0xb0] sm:$0xf]
    %v62 = vld [vmem:[%s0 + $0xb4] sm:$0xf]
    %v63 = vld [vmem:[%s0 + $0xb8] sm:$0xf]
    %v64 = vld [vmem:[%s0 + $0xbc] sm:$0xf]
    %v65 = vld [vmem:[%s0 + $0xc0] sm:$0xf]
    %v66 = vld [vmem:[%s0 + $0xc4] sm:$0xf]
    %v67 = vld [vmem:[%s0 + $0xc8] sm:$0xf]
    %v68 = vld [vmem:[%s0 + $0xcc] sm:$0xf]
    %v69 = vld [vmem:[%s0 + $0xd0] sm:$0xf]
    %v70 = vld [vmem:[%s0 + $0xd4] sm:$0xf]
    %v71 = vld [vmem:[%s0 + $0xd8] sm:$0xf]
    %v72 = vld [vmem:[%s0 + $0xdc] sm:$0xf]
    %v73 = vld [vmem:[%s0 + $0xe0] sm:$0xf]
    %v74 = vld [vmem:[%s0 + $0xe4] sm:$0xf]
    %v75 = vld [vmem:[%s0 + $0xe8] sm:$0xf]
    %v76 = vld [vmem:[%s0 + $0xec] sm:$0xf]
    %v77 = vld [vmem:[%s0 + $0xf0] sm:$0xf]
    %v78 = vld [vmem:[%s0 + $0xf4] sm:$0xf]
    %v79 = vld [vmem:[%s0 + $0xf8] sm:$0xf]
    %v80 = vld [vmem:[%s0 + $0xfc] sm:$0xf]
    %v81 = vld [vmem:[%s1] sm:$0xf]
    %v82 = vld [vmem:[%s1 + $0x4] sm:$0xf]
    %v83 = vld [vmem:[%s1 + $0x8] sm:$0xf]
    %v84 = vld [vmem:[%s1 + $0xc] sm:$0xf]
    %v85 = vld [vmem:[%s1 + $0x10] sm:$0x3]
    %v150 = vunpack.c.l.b16 %v17
    %v151 = vunpack.c.l.b16 %v18
    %v152 = vunpack.c.l.b16 %v19
    %v153 = vunpack.c.l.b16 %v20
    %v154 = vunpack.c.l.b16 %v21
    %v155 = vunpack.c.l.b16 %v22
    %v156 = vunpack.c.l.b16 %v23
    %v157 = vunpack.c.l.b16 %v24
    %v158 = vunpack.c.l.b16 %v25
    %v159 = vunpack.c.l.b16 %v26
    %v160 = vunpack.c.l.b16 %v27
    %v161 = vunpack.c.l.b16 %v28
    %v162 = vunpack.c.l.b16 %v29
    %v163 = vunpack.c.l.b16 %v30
    %v164 = vunpack.c.l.b16 %v31
    %v165 = vunpack.c.l.b16 %v32
    %v166 = vunpack.c.l.b16 %v33
    %v167 = vunpack.c.l.b16 %v34
    %v168 = vunpack.c.l.b16 %v35
    %v169 = vunpack.c.l.b16 %v36
    %v170 = vunpack.c.l.b16 %v37
    %v171 = vunpack.c.l.b16 %v38
    %v172 = vunpack.c.l.b16 %v39
    %v173 = vunpack.c.l.b16 %v40
    %v174 = vunpack.c.l.b16 %v41
    %v175 = vunpack.c.l.b16 %v42
    %v176 = vunpack.c.l.b16 %v43
    %v177 = vunpack.c.l.b16 %v44
    %v178 = vunpack.c.l.b16 %v45
    %v179 = vunpack.c.l.b16 %v46
    %v180 = vunpack.c.l.b16 %v47
    %v181 = vunpack.c.l.b16 %v48
    %v182 = vunpack.c.l.b16 %v49
    %v183 = vunpack.c.l.b16 %v50
    %v184 = vunpack.c.l.b16 %v51
    %v185 = vunpack.c.l.b16 %v52
    %v186 = vunpack.c.l.b16 %v53
    %v187 = vunpack.c.l.b16 %v54
    %v188 = vunpack.c.l.b16 %v55
    %v189 = vunpack.c.l.b16 %v56
    %v190 = vunpack.c.l.b16 %v57
    %v191 = vunpack.c.l.b16 %v58
    %v192 = vunpack.c.l.b16 %v59
    %v193 = vunpack.c.l.b16 %v60
    %v194 = vunpack.c.l.b16 %v61
    %v195 = vunpack.c.l.b16 %v62
    %v196 = vunpack.c.l.b16 %v63
    %v197 = vunpack.c.l.b16 %v64
    %v198 = vunpack.c.l.b16 %v65
    %v199 = vunpack.c.l.b16 %v66
    %v200 = vunpack.c.l.b16 %v67
    %v201 = vunpack.c.l.b16 %v68
    %v202 = vunpack.c.l.b16 %v69
    %v203 = vunpack.c.l.b16 %v70
    %v204 = vunpack.c.l.b16 %v71
    %v205 = vunpack.c.l.b16 %v72
    %v206 = vunpack.c.l.b16 %v73
    %v207 = vunpack.c.l.b16 %v74
    %v208 = vunpack.c.l.b16 %v75
    %v209 = vunpack.c.l.b16 %v76
    %v210 = vunpack.c.l.b16 %v77
    %v211 = vunpack.c.l.b16 %v78
    %v212 = vunpack.c.l.b16 %v79
    %v213 = vunpack.c.l.b16 %v80
    %v214 = vpack.c.b16 %v151, %v150
    %v215 = vpack.c.b16 %v153, %v152
    %v216 = vpack.c.b16 %v155, %v154
    %v217 = vpack.c.b16 %v157, %v156
    %v218 = vpack.c.b16 %v159, %v158
    %v219 = vpack.c.b16 %v161, %v160
    %v220 = vpack.c.b16 %v163, %v162
    %v221 = vpack.c.b16 %v165, %v164
    %v222 = vpack.c.b16 %v167, %v166
    %v223 = vpack.c.b16 %v169, %v168
    %v224 = vpack.c.b16 %v171, %v170
    %v225 = vpack.c.b16 %v173, %v172
    %v226 = vpack.c.b16 %v175, %v174
    %v227 = vpack.c.b16 %v177, %v176
    %v228 = vpack.c.b16 %v179, %v178
    %v229 = vpack.c.b16 %v181, %v180
    %v230 = vpack.c.b16 %v183, %v182
    %v231 = vpack.c.b16 %v185, %v184
    %v232 = vpack.c.b16 %v187, %v186
    %v233 = vpack.c.b16 %v189, %v188
    %v234 = vpack.c.b16 %v191, %v190
    %v235 = vpack.c.b16 %v193, %v192
    %v236 = vpack.c.b16 %v195, %v194
    %v237 = vpack.c.b16 %v197, %v196
    %v238 = vpack.c.b16 %v199, %v198
    %v239 = vpack.c.b16 %v201, %v200
    %v240 = vpack.c.b16 %v203, %v202
    %v241 = vpack.c.b16 %v205, %v204
    %v242 = vpack.c.b16 %v207, %v206
    %v243 = vpack.c.b16 %v209, %v208
    %v244 = vpack.c.b16 %v211, %v210
    %v245 = vpack.c.b16 %v213, %v212
    %v251 = vunpack.c.l.b16 %v81
    %v252 = vunpack.c.l.b16 %v82
    %v253 = vunpack.c.l.b16 %v83
    %v254 = vunpack.c.l.b16 %v84
    %v255 = vunpack.c.l.b16 %v85
    %v256 = vpack.c.b16 %v252, %v251
    %v257 = vpack.c.b16 %v254, %v253
    %v258 = vpack.c.b16 %v255, %v255
    %vm261 = vcmask 293888
    %v263 = vsel %vm261, %v214, 0
    %v266 = vsel %vm261, %v215, 0
    %v269 = vsel %vm261, %v216, 0
    %v272 = vsel %vm261, %v217, 0
    %v275 = vsel %vm261, %v218, 0
    %v278 = vsel %vm261, %v219, 0
    %v281 = vsel %vm261, %v220, 0
    %v284 = vsel %vm261, %v221, 0
    %v287 = vsel %vm261, %v222, 0
    %v290 = vsel %vm261, %v223, 0
    %v293 = vsel %vm261, %v224, 0
    %v296 = vsel %vm261, %v225, 0
    %v299 = vsel %vm261, %v226, 0
    %v302 = vsel %vm261, %v227, 0
    %v305 = vsel %vm261, %v228, 0
    %v308 = vsel %vm261, %v229, 0
    %v311 = vsel %vm261, %v230, 0
    %v314 = vsel %vm261, %v231, 0
    %v317 = vsel %vm261, %v232, 0
    %v320 = vsel %vm261, %v233, 0
    %v323 = vsel %vm261, %v234, 0
    %v326 = vsel %vm261, %v235, 0
    %v329 = vsel %vm261, %v236, 0
    %v332 = vsel %vm261, %v237, 0
    %v335 = vsel %vm261, %v238, 0
    %v338 = vsel %vm261, %v239, 0
    %v341 = vsel %vm261, %v240, 0
    %v344 = vsel %vm261, %v241, 0
    %v347 = vsel %vm261, %v242, 0
    %v350 = vsel %vm261, %v243, 0
    %v353 = vsel %vm261, %v244, 0
    %v356 = vsel %vm261, %v245, 0
    %vm358 = vcmask 1041408
    %v360 = vsel %vm358, %v258, 0
    %362 = vmatprep.subr.bf16.mxu0 0
    %363 = vmatpush1.bf16.msra.mxu0 %v256
    %364 = vmatprep.subr.bf16.mxu0 0
    %365 = vmatpush1.bf16.msra.mxu0 %v257
    %366 = vmatprep.subr.bf16.mxu0 0
    %367 = vmatpush1.bf16.msra.mxu0 %v360
    %368 = vmatprep.subr.bf16.mxu0 0
    %369 = vmatpush1.bf16.msra.mxu0 0
    %370 = vmatprep.subr.bf16.mxu0 0
    %371 = vmatpush1.bf16.msra.mxu0 0
    %372 = vmatprep.subr.bf16.mxu0 0
    %373 = vmatpush1.bf16.msra.mxu0 0
    %374 = vmatprep.subr.bf16.mxu0 0
    %375 = vmatpush1.bf16.msra.mxu0 0
    %376 = vmatprep.subr.bf16.mxu0 0
    %377 = vmatpush1.bf16.msra.mxu0 0
    %378 = vmatprep.subr.bf16.mxu0 0
    %379 = vmatpush1.bf16.msra.mxu0 0
    %380 = vmatprep.subr.bf16.mxu0 0
    %381 = vmatpush1.bf16.msra.mxu0 0
    %382 = vmatprep.subr.bf16.mxu0 0
    %383 = vmatpush1.bf16.msra.mxu0 0
    %384 = vmatprep.subr.bf16.mxu0 0
    %385 = vmatpush1.bf16.msra.mxu0 0
    %386 = vmatprep.subr.bf16.mxu0 0
    %387 = vmatpush1.bf16.msra.mxu0 0
    %388 = vmatprep.subr.bf16.mxu0 0
    %389 = vmatpush1.bf16.msra.mxu0 0
    %390 = vmatprep.subr.bf16.mxu0 0
    %391 = vmatpush1.bf16.msra.mxu0 0
    %392 = vmatprep.subr.bf16.mxu0 0
    %393 = vmatpush1.bf16.msra.mxu0 0
    %394 = vmatprep.mubr.bf16.mxu0 0
    %395 = vmatmul.mubr.bf16.gmra.mrb[0].mxu0 %v263
    %v396 = vpop.f32.mrb[0].mxu0
    %v397 = vadd.f32 0.0, %v396
    %v398 = vpop.f32.mrb[0].mxu0
    %v399 = vpop.f32.mrb[0].mxu0
    %v400 = vadd.f32 0.0, %v399
    %v401 = vpop.f32.mrb[0].mxu0
    %402 = vmatprep.mubr.bf16.mxu0 0
    %403 = vmatmul.mubr.bf16.gmra.mrb[0].mxu0 %v266
    %v404 = vpop.f32.mrb[0].mxu0
    %v405 = vadd.f32 0.0, %v404
    %v406 = vpop.f32.mrb[0].mxu0
    %v407 = vpop.f32.mrb[0].mxu0
    %v408 = vadd.f32 0.0, %v407
    %v409 = vpop.f32.mrb[0].mxu0
    %410 = vmatprep.mubr.bf16.mxu0 0
    %411 = vmatmul.mubr.bf16.gmra.mrb[0].mxu0 %v269
    %v412 = vpop.f32.mrb[0].mxu0
    %v413 = vadd.f32 0.0, %v412
    %v414 = vpop.f32.mrb[0].mxu0
    %v415 = vpop.f32.mrb[0].mxu0
    %v416 = vadd.f32 0.0, %v415
    %v417 = vpop.f32.mrb[0].mxu0
    %418 = vmatprep.mubr.bf16.mxu0 0
    %419 = vmatmul.mubr.bf16.gmra.mrb[0].mxu0 %v272
    %v420 = vpop.f32.mrb[0].mxu0
    %v421 = vadd.f32 0.0, %v420
    %v422 = vpop.f32.mrb[0].mxu0
    %v423 = vpop.f32.mrb[0].mxu0
    %v424 = vadd.f32 0.0, %v423
    %v425 = vpop.f32.mrb[0].mxu0
    %426 = vmatprep.mubr.bf16.mxu0 0
    %427 = vmatmul.mubr.bf16.gmra.mrb[0].mxu0 %v275
    %v428 = vpop.f32.mrb[0].mxu0
    %v429 = vadd.f32 0.0, %v428
    %v430 = vpop.f32.mrb[0].mxu0
    %v431 = vpop.f32.mrb[0].mxu0
    %v432 = vadd.f32 0.0, %v431
    %v433 = vpop.f32.mrb[0].mxu0
    %434 = vmatprep.mubr.bf16.mxu0 0
    %435 = vmatmul.mubr.bf16.gmra.mrb[0].mxu0 %v278
    %v436 = vpop.f32.mrb[0].mxu0
    %v437 = vadd.f32 0.0, %v436
    %v438 = vpop.f32.mrb[0].mxu0
    %v439 = vpop.f32.mrb[0].mxu0
    %v440 = vadd.f32 0.0, %v439
    %v441 = vpop.f32.mrb[0].mxu0
    %442 = vmatprep.mubr.bf16.mxu0 0
    %443 = vmatmul.mubr.bf16.gmra.mrb[0].mxu0 %v281
    %v444 = vpop.f32.mrb[0].mxu0
    %v445 = vadd.f32 0.0, %v444
    %v446 = vpop.f32.mrb[0].mxu0
    %v447 = vpop.f32.mrb[0].mxu0
    %v448 = vadd.f32 0.0, %v447
    %v449 = vpop.f32.mrb[0].mxu0
    %450 = vmatprep.mubr.bf16.mxu0 0
    %451 = vmatmul.mubr.bf16.gmra.mrb[0].mxu0 %v284
    %v452 = vpop.f32.mrb[0].mxu0
    %v453 = vadd.f32 0.0, %v452
    %v454 = vpop.f32.mrb[0].mxu0
    %v455 = vpop.f32.mrb[0].mxu0
    %v456 = vadd.f32 0.0, %v455
    %v457 = vpop.f32.mrb[0].mxu0
    %458 = vmatprep.mubr.bf16.mxu0 0
    %459 = vmatmul.mubr.bf16.gmra.mrb[0].mxu0 %v287
    %v460 = vpop.f32.mrb[0].mxu0
    %v461 = vadd.f32 0.0, %v460
    %v462 = vpop.f32.mrb[0].mxu0
    %v463 = vpop.f32.mrb[0].mxu0
    %v464 = vadd.f32 0.0, %v463
    %v465 = vpop.f32.mrb[0].mxu0
    %466 = vmatprep.mubr.bf16.mxu0 0
    %467 = vmatmul.mubr.bf16.gmra.mrb[0].mxu0 %v290
    %v468 = vpop.f32.mrb[0].mxu0
    %v469 = vadd.f32 0.0, %v468
    %v470 = vpop.f32.mrb[0].mxu0
    %v471 = vpop.f32.mrb[0].mxu0
    %v472 = vadd.f32 0.0, %v471
    %v473 = vpop.f32.mrb[0].mxu0
    %474 = vmatprep.mubr.bf16.mxu0 0
    %475 = vmatmul.mubr.bf16.gmra.mrb[0].mxu0 %v293
    %v476 = vpop.f32.mrb[0].mxu0
    %v477 = vadd.f32 0.0, %v476
    %v478 = vpop.f32.mrb[0].mxu0
    %v479 = vpop.f32.mrb[0].mxu0
    %v480 = vadd.f32 0.0, %v479
    %v481 = vpop.f32.mrb[0].mxu0
    %482 = vmatprep.mubr.bf16.mxu0 0
    %483 = vmatmul.mubr.bf16.gmra.mrb[0].mxu0 %v296
    %v484 = vpop.f32.mrb[0].mxu0
    %v485 = vadd.f32 0.0, %v484
    %v486 = vpop.f32.mrb[0].mxu0
    %v487 = vpop.f32.mrb[0].mxu0
    %v488 = vadd.f32 0.0, %v487
    %v489 = vpop.f32.mrb[0].mxu0
    %490 = vmatprep.mubr.bf16.mxu0 0
    %491 = vmatmul.mubr.bf16.gmra.mrb[0].mxu0 %v299
    %v492 = vpop.f32.mrb[0].mxu0
    %v493 = vadd.f32 0.0, %v492
    %v494 = vpop.f32.mrb[0].mxu0
    %v495 = vpop.f32.mrb[0].mxu0
    %v496 = vadd.f32 0.0, %v495
    %v497 = vpop.f32.mrb[0].mxu0
    %498 = vmatprep.mubr.bf16.mxu0 0
    %499 = vmatmul.mubr.bf16.gmra.mrb[0].mxu0 %v302
    %v500 = vpop.f32.mrb[0].mxu0
    %v501 = vadd.f32 0.0, %v500
    %v502 = vpop.f32.mrb[0].mxu0
    %v503 = vpop.f32.mrb[0].mxu0
    %v504 = vadd.f32 0.0, %v503
    %v505 = vpop.f32.mrb[0].mxu0
    %506 = vmatprep.mubr.bf16.mxu0 0
    %507 = vmatmul.mubr.bf16.gmra.mrb[0].mxu0 %v305
    %v508 = vpop.f32.mrb[0].mxu0
    %v509 = vadd.f32 0.0, %v508
    %v510 = vpop.f32.mrb[0].mxu0
    %v511 = vpop.f32.mrb[0].mxu0
    %v512 = vadd.f32 0.0, %v511
    %v513 = vpop.f32.mrb[0].mxu0
    %514 = vmatprep.mubr.bf16.mxu0 0
    %515 = vmatmul.mubr.bf16.gmra.mrb[0].mxu0 %v308
    %v516 = vpop.f32.mrb[0].mxu0
    %v517 = vadd.f32 0.0, %v516
    %v518 = vpop.f32.mrb[0].mxu0
    %v519 = vpop.f32.mrb[0].mxu0
    %v520 = vadd.f32 0.0, %v519
    %v521 = vpop.f32.mrb[0].mxu0
    %522 = vmatprep.mubr.bf16.mxu0 0
    %523 = vmatmul.mubr.bf16.gmra.mrb[0].mxu0 %v311
    %v524 = vpop.f32.mrb[0].mxu0
    %v525 = vadd.f32 0.0, %v524
    %v526 = vpop.f32.mrb[0].mxu0
    %v527 = vpop.f32.mrb[0].mxu0
    %v528 = vadd.f32 0.0, %v527
    %v529 = vpop.f32.mrb[0].mxu0
    %530 = vmatprep.mubr.bf16.mxu0 0
    %531 = vmatmul.mubr.bf16.gmra.mrb[0].mxu0 %v314
    %v532 = vpop.f32.mrb[0].mxu0
    %v533 = vadd.f32 0.0, %v532
    %v534 = vpop.f32.mrb[0].mxu0
    %v535 = vpop.f32.mrb[0].mxu0
    %v536 = vadd.f32 0.0, %v535
    %v537 = vpop.f32.mrb[0].mxu0
    %538 = vmatprep.mubr.bf16.mxu0 0
    %539 = vmatmul.mubr.bf16.gmra.mrb[0].mxu0 %v317
    %v540 = vpop.f32.mrb[0].mxu0
    %v541 = vadd.f32 0.0, %v540
    %v542 = vpop.f32.mrb[0].mxu0
    %v543 = vpop.f32.mrb[0].mxu0
    %v544 = vadd.f32 0.0, %v543
    %v545 = vpop.f32.mrb[0].mxu0
    %546 = vmatprep.mubr.bf16.mxu0 0
    %547 = vmatmul.mubr.bf16.gmra.mrb[0].mxu0 %v320
    %v548 = vpop.f32.mrb[0].mxu0
    %v549 = vadd.f32 0.0, %v548
    %v550 = vpop.f32.mrb[0].mxu0
    %v551 = vpop.f32.mrb[0].mxu0
    %v552 = vadd.f32 0.0, %v551
    %v553 = vpop.f32.mrb[0].mxu0
    %554 = vmatprep.mubr.bf16.mxu0 0
    %555 = vmatmul.mubr.bf16.gmra.mrb[0].mxu0 %v323
    %v556 = vpop.f32.mrb[0].mxu0
    %v557 = vadd.f32 0.0, %v556
    %v558 = vpop.f32.mrb[0].mxu0
    %v559 = vpop.f32.mrb[0].mxu0
    %v560 = vadd.f32 0.0, %v559
    %v561 = vpop.f32.mrb[0].mxu0
    %562 = vmatprep.mubr.bf16.mxu0 0
    %563 = vmatmul.mubr.bf16.gmra.mrb[0].mxu0 %v326
    %v564 = vpop.f32.mrb[0].mxu0
    %v565 = vadd.f32 0.0, %v564
    %v566 = vpop.f32.mrb[0].mxu0
    %v567 = vpop.f32.mrb[0].mxu0
    %v568 = vadd.f32 0.0, %v567
    %v569 = vpop.f32.mrb[0].mxu0
    %570 = vmatprep.mubr.bf16.mxu0 0
    %571 = vmatmul.mubr.bf16.gmra.mrb[0].mxu0 %v329
    %v572 = vpop.f32.mrb[0].mxu0
    %v573 = vadd.f32 0.0, %v572
    %v574 = vpop.f32.mrb[0].mxu0
    %v575 = vpop.f32.mrb[0].mxu0
    %v576 = vadd.f32 0.0, %v575
    %v577 = vpop.f32.mrb[0].mxu0
    %578 = vmatprep.mubr.bf16.mxu0 0
    %579 = vmatmul.mubr.bf16.gmra.mrb[0].mxu0 %v332
    %v580 = vpop.f32.mrb[0].mxu0
    %v581 = vadd.f32 0.0, %v580
    %v582 = vpop.f32.mrb[0].mxu0
    %v583 = vpop.f32.mrb[0].mxu0
    %v584 = vadd.f32 0.0, %v583
    %v585 = vpop.f32.mrb[0].mxu0
    %586 = vmatprep.mubr.bf16.mxu0 0
    %587 = vmatmul.mubr.bf16.gmra.mrb[0].mxu0 %v335
    %v588 = vpop.f32.mrb[0].mxu0
    %v589 = vadd.f32 0.0, %v588
    %v590 = vpop.f32.mrb[0].mxu0
    %v591 = vpop.f32.mrb[0].mxu0
    %v592 = vadd.f32 0.0, %v591
    %v593 = vpop.f32.mrb[0].mxu0
    %594 = vmatprep.mubr.bf16.mxu0 0
    %595 = vmatmul.mubr.bf16.gmra.mrb[0].mxu0 %v338
    %v596 = vpop.f32.mrb[0].mxu0
    %v597 = vadd.f32 0.0, %v596
    %v598 = vpop.f32.mrb[0].mxu0
    %v599 = vpop.f32.mrb[0].mxu0
    %v600 = vadd.f32 0.0, %v599
    %v601 = vpop.f32.mrb[0].mxu0
    %602 = vmatprep.mubr.bf16.mxu0 0
    %603 = vmatmul.mubr.bf16.gmra.mrb[0].mxu0 %v341
    %v604 = vpop.f32.mrb[0].mxu0
    %v605 = vadd.f32 0.0, %v604
    %v606 = vpop.f32.mrb[0].mxu0
    %v607 = vpop.f32.mrb[0].mxu0
    %v608 = vadd.f32 0.0, %v607
    %v609 = vpop.f32.mrb[0].mxu0
    %610 = vmatprep.mubr.bf16.mxu0 0
    %611 = vmatmul.mubr.bf16.gmra.mrb[0].mxu0 %v344
    %v612 = vpop.f32.mrb[0].mxu0
    %v613 = vadd.f32 0.0, %v612
    %v614 = vpop.f32.mrb[0].mxu0
    %v615 = vpop.f32.mrb[0].mxu0
    %v616 = vadd.f32 0.0, %v615
    %v617 = vpop.f32.mrb[0].mxu0
    %618 = vmatprep.mubr.bf16.mxu0 0
    %619 = vmatmul.mubr.bf16.gmra.mrb[0].mxu0 %v347
    %v620 = vpop.f32.mrb[0].mxu0
    %v621 = vadd.f32 0.0, %v620
    %v622 = vpop.f32.mrb[0].mxu0
    %v623 = vpop.f32.mrb[0].mxu0
    %v624 = vadd.f32 0.0, %v623
    %v625 = vpop.f32.mrb[0].mxu0
    %626 = vmatprep.mubr.bf16.mxu0 0
    %627 = vmatmul.mubr.bf16.gmra.mrb[0].mxu0 %v350
    %v628 = vpop.f32.mrb[0].mxu0
    %v629 = vadd.f32 0.0, %v628
    %v630 = vpop.f32.mrb[0].mxu0
    %v631 = vpop.f32.mrb[0].mxu0
    %v632 = vadd.f32 0.0, %v631
    %v633 = vpop.f32.mrb[0].mxu0
    %634 = vmatprep.mubr.bf16.mxu0 0
    %635 = vmatmul.mubr.bf16.gmra.mrb[0].mxu0 %v353
    %v636 = vpop.f32.mrb[0].mxu0
    %v637 = vadd.f32 0.0, %v636
    %v638 = vpop.f32.mrb[0].mxu0
    %v639 = vpop.f32.mrb[0].mxu0
    %v640 = vadd.f32 0.0, %v639
    %v641 = vpop.f32.mrb[0].mxu0
    %642 = vmatprep.mubr.bf16.mxu0 0
    %643 = vmatmul.mubr.bf16.gmra.mrb[0].mxu0 %v356
    %v644 = vpop.f32.mrb[0].mxu0
    %v645 = vadd.f32 0.0, %v644
    %v646 = vpop.f32.mrb[0].mxu0
    %v647 = vpop.f32.mrb[0].mxu0
    %v648 = vadd.f32 0.0, %v647
    %v649 = vpop.f32.mrb[0].mxu0
    %650 = vdwg.mxu0
    %651 = vst [vmem:[#allocation2] sm:$0xff] %v397
    %652 = vst [vmem:[#allocation2 + $0x8] sm:$0xff] %v400
    %653 = vst [vmem:[#allocation2 + $0x10] sm:$0xff] %v405
    %654 = vst [vmem:[#allocation2 + $0x18] sm:$0xff] %v408
    %655 = vst [vmem:[#allocation2 + $0x20] sm:$0xff] %v413
    %656 = vst [vmem:[#allocation2 + $0x28] sm:$0xff] %v416
    %657 = vst [vmem:[#allocation2 + $0x30] sm:$0xff] %v421
    %658 = vst [vmem:[#allocation2 + $0x38] sm:$0xff] %v424
    %659 = vst [vmem:[#allocation2 + $0x40] sm:$0xff] %v429
    %660 = vst [vmem:[#allocation2 + $0x48] sm:$0xff] %v432
    %661 = vst [vmem:[#allocation2 + $0x50] sm:$0xff] %v437
    %662 = vst [vmem:[#allocation2 + $0x58] sm:$0xff] %v440
    %663 = vst [vmem:[#allocation2 + $0x60] sm:$0xff] %v445
    %664 = vst [vmem:[#allocation2 + $0x68] sm:$0xff] %v448
    %665 = vst [vmem:[#allocation2 + $0x70] sm:$0xff] %v453
    %666 = vst [vmem:[#allocation2 + $0x78] sm:$0xff] %v456
    %667 = vst [vmem:[#allocation2 + $0x80] sm:$0xff] %v461
    %668 = vst [vmem:[#allocation2 + $0x88] sm:$0xff] %v464
    %669 = vst [vmem:[#allocation2 + $0x90] sm:$0xff] %v469
    %670 = vst [vmem:[#allocation2 + $0x98] sm:$0xff] %v472
    %671 = vst [vmem:[#allocation2 + $0xa0] sm:$0xff] %v477
    %672 = vst [vmem:[#allocation2 + $0xa8] sm:$0xff] %v480
    %673 = vst [vmem:[#allocation2 + $0xb0] sm:$0xff] %v485
    %674 = vst [vmem:[#allocation2 + $0xb8] sm:$0xff] %v488
    %675 = vst [vmem:[#allocation2 + $0xc0] sm:$0xff] %v493
    %676 = vst [vmem:[#allocation2 + $0xc8] sm:$0xff] %v496
    %677 = vst [vmem:[#allocation2 + $0xd0] sm:$0xff] %v501
    %678 = vst [vmem:[#allocation2 + $0xd8] sm:$0xff] %v504
    %679 = vst [vmem:[#allocation2 + $0xe0] sm:$0xff] %v509
    %680 = vst [vmem:[#allocation2 + $0xe8] sm:$0xff] %v512
    %681 = vst [vmem:[#allocation2 + $0xf0] sm:$0xff] %v517
    %682 = vst [vmem:[#allocation2 + $0xf8] sm:$0xff] %v520
    %683 = vst [vmem:[#allocation2 + $0x100] sm:$0xff] %v525
    %684 = vst [vmem:[#allocation2 + $0x108] sm:$0xff] %v528
    %685 = vst [vmem:[#allocation2 + $0x110] sm:$0xff] %v533
    %686 = vst [vmem:[#allocation2 + $0x118] sm:$0xff] %v536
    %687 = vst [vmem:[#allocation2 + $0x120] sm:$0xff] %v541
    %688 = vst [vmem:[#allocation2 + $0x128] sm:$0xff] %v544
    %689 = vst [vmem:[#allocation2 + $0x130] sm:$0xff] %v549
    %690 = vst [vmem:[#allocation2 + $0x138] sm:$0xff] %v552
    %691 = vst [vmem:[#allocation2 + $0x140] sm:$0xff] %v557
    %692 = vst [vmem:[#allocation2 + $0x148] sm:$0xff] %v560
    %693 = vst [vmem:[#allocation2 + $0x150] sm:$0xff] %v565
    %694 = vst [vmem:[#allocation2 + $0x158] sm:$0xff] %v568
    %695 = vst [vmem:[#allocation2 + $0x160] sm:$0xff] %v573
    %696 = vst [vmem:[#allocation2 + $0x168] sm:$0xff] %v576
    %697 = vst [vmem:[#allocation2 + $0x170] sm:$0xff] %v581
    %698 = vst [vmem:[#allocation2 + $0x178] sm:$0xff] %v584
    %699 = vst [vmem:[#allocation2 + $0x180] sm:$0xff] %v589
    %700 = vst [vmem:[#allocation2 + $0x188] sm:$0xff] %v592
    %701 = vst [vmem:[#allocation2 + $0x190] sm:$0xff] %v597
    %702 = vst [vmem:[#allocation2 + $0x198] sm:$0xff] %v600
    %703 = vst [vmem:[#allocation2 + $0x1a0] sm:$0xff] %v605
    %704 = vst [vmem:[#allocation2 + $0x1a8] sm:$0xff] %v608
    %705 = vst [vmem:[#allocation2 + $0x1b0] sm:$0xff] %v613
    %706 = vst [vmem:[#allocation2 + $0x1b8] sm:$0xff] %v616
    %707 = vst [vmem:[#allocation2 + $0x1c0] sm:$0xff] %v621
    %708 = vst [vmem:[#allocation2 + $0x1c8] sm:$0xff] %v624
    %709 = vst [vmem:[#allocation2 + $0x1d0] sm:$0xff] %v629
    %710 = vst [vmem:[#allocation2 + $0x1d8] sm:$0xff] %v632
    %711 = vst [vmem:[#allocation2 + $0x1e0] sm:$0xff] %v637
    %712 = vst [vmem:[#allocation2 + $0x1e8] sm:$0xff] %v640
    %713 = vst [vmem:[#allocation2 + $0x1f0] sm:$0xff] %v645
    %714 = vst [vmem:[#allocation2 + $0x1f8] sm:$0xff] %v648
    %v715 = vadd.f32 %v397, %v400
    %v716 = vadd.f32 %v715, %v405
    %v717 = vadd.f32 %v716, %v408
    %v718 = vadd.f32 %v717, %v413
    %v719 = vadd.f32 %v718, %v416
    %v720 = vadd.f32 %v719, %v421
    %v721 = vadd.f32 %v720, %v424
    %v722 = vadd.f32 %v721, %v429
    %v723 = vadd.f32 %v722, %v432
    %v724 = vadd.f32 %v723, %v437
    %v725 = vadd.f32 %v724, %v440
    %v726 = vadd.f32 %v725, %v445
    %v727 = vadd.f32 %v726, %v448
    %v728 = vadd.f32 %v727, %v453
    %v729 = vadd.f32 %v728, %v456
    %v730 = vadd.f32 %v729, %v461
    %v731 = vadd.f32 %v730, %v464
    %v732 = vadd.f32 %v731, %v469
    %v733 = vadd.f32 %v732, %v472
    %v734 = vadd.f32 %v733, %v477
    %v735 = vadd.f32 %v734, %v480
    %v736 = vadd.f32 %v735, %v485
    %v737 = vadd.f32 %v736, %v488
    %v738 = vadd.f32 %v737, %v493
    %v739 = vadd.f32 %v738, %v496
    %v740 = vadd.f32 %v739, %v501
    %v741 = vadd.f32 %v740, %v504
    %v742 = vadd.f32 %v741, %v509
    %v743 = vadd.f32 %v742, %v512
    %v744 = vadd.f32 %v743, %v517
    %v745 = vadd.f32 %v744, %v520
    %v746 = vadd.f32 %v745, %v525
    %v747 = vadd.f32 %v746, %v528
    %v748 = vadd.f32 %v747, %v533
    %v749 = vadd.f32 %v748, %v536
    %v750 = vadd.f32 %v749, %v541
    %v751 = vadd.f32 %v750, %v544
    %v752 = vadd.f32 %v751, %v549
    %v753 = vadd.f32 %v752, %v552
    %v754 = vadd.f32 %v753, %v557
    %v755 = vadd.f32 %v754, %v560
    %v756 = vadd.f32 %v755, %v565
    %v757 = vadd.f32 %v756, %v568
    %v758 = vadd.f32 %v757, %v573
    %v759 = vadd.f32 %v758, %v576
    %v760 = vadd.f32 %v759, %v581
    %v761 = vadd.f32 %v760, %v584
    %v762 = vadd.f32 %v761, %v589
    %v763 = vadd.f32 %v762, %v592
    %v764 = vadd.f32 %v763, %v597
    %v765 = vadd.f32 %v764, %v600
    %v766 = vadd.f32 %v765, %v605
    %v767 = vadd.f32 %v766, %v608
    %v768 = vadd.f32 %v767, %v613
    %v769 = vadd.f32 %v768, %v616
    %v770 = vadd.f32 %v769, %v621
    %v771 = vadd.f32 %v770, %v624
    %v772 = vadd.f32 %v771, %v629
    %v773 = vadd.f32 %v772, %v632
    %v774 = vadd.f32 %v773, %v637
    %v775 = vadd.f32 %v774, %v640
    %v776 = vadd.f32 %v775, %v645
    %v777 = vadd.f32 %v776, %v648
    %v778 = vrot.slane %v777, 4
    %v779 = vadd.f32 %v777, %v778
    %v780 = vrot.slane %v779, 2
    %v781 = vadd.f32 %v779, %v780
    %v782 = vrot.slane %v781, 1
    %v783 = vadd.f32 %v781, %v782
    %784 = vst [vmem:[#allocation4] sm:$0x1] %v783
    %v785 = vmul.f32 %v397, %v397
    %v786 = vmul.f32 %v400, %v400
    %v787 = vmul.f32 %v405, %v405
    %v788 = vmul.f32 %v408, %v408
    %v789 = vmul.f32 %v413, %v413
    %v790 = vmul.f32 %v416, %v416
    %v791 = vmul.f32 %v421, %v421
    %v792 = vmul.f32 %v424, %v424
    %v793 = vmul.f32 %v429, %v429
    %v794 = vmul.f32 %v432, %v432
    %v795 = vmul.f32 %v437, %v437
    %v796 = vmul.f32 %v440, %v440
    %v797 = vmul.f32 %v445, %v445
    %v798 = vmul.f32 %v448, %v448
    %v799 = vmul.f32 %v453, %v453
    %v800 = vmul.f32 %v456, %v456
    %v801 = vmul.f32 %v461, %v461
    %v802 = vmul.f32 %v464, %v464
    %v803 = vmul.f32 %v469, %v469
    %v804 = vmul.f32 %v472, %v472
    %v805 = vmul.f32 %v477, %v477
    %v806 = vmul.f32 %v480, %v480
    %v807 = vmul.f32 %v485, %v485
    %v808 = vmul.f32 %v488, %v488
    %v809 = vmul.f32 %v493, %v493
    %v810 = vmul.f32 %v496, %v496
    %v811 = vmul.f32 %v501, %v501
    %v812 = vmul.f32 %v504, %v504
    %v813 = vmul.f32 %v509, %v509
    %v814 = vmul.f32 %v512, %v512
    %v815 = vmul.f32 %v517, %v517
    %v816 = vmul.f32 %v520, %v520
    %v817 = vmul.f32 %v525, %v525
    %v818 = vmul.f32 %v528, %v528
    %v819 = vmul.f32 %v533, %v533
    %v820 = vmul.f32 %v536, %v536
    %v821 = vmul.f32 %v541, %v541
    %v822 = vmul.f32 %v544, %v544
    %v823 = vmul.f32 %v549, %v549
    %v824 = vmul.f32 %v552, %v552
    %v825 = vmul.f32 %v557, %v557
    %v826 = vmul.f32 %v560, %v560
    %v827 = vmul.f32 %v565, %v565
    %v828 = vmul.f32 %v568, %v568
    %v829 = vmul.f32 %v573, %v573
    %v830 = vmul.f32 %v576, %v576
    %v831 = vmul.f32 %v581, %v581
    %v832 = vmul.f32 %v584, %v584
    %v833 = vmul.f32 %v589, %v589
    %v834 = vmul.f32 %v592, %v592
    %v835 = vmul.f32 %v597, %v597
    %v836 = vmul.f32 %v600, %v600
    %v837 = vmul.f32 %v605, %v605
    %v838 = vmul.f32 %v608, %v608
    %v839 = vmul.f32 %v613, %v613
    %v840 = vmul.f32 %v616, %v616
    %v841 = vmul.f32 %v621, %v621
    %v842 = vmul.f32 %v624, %v624
    %v843 = vmul.f32 %v629, %v629
    %v844 = vmul.f32 %v632, %v632
    %v845 = vmul.f32 %v637, %v637
    %v846 = vmul.f32 %v640, %v640
    %v847 = vmul.f32 %v645, %v645
    %v848 = vmul.f32 %v648, %v648
    %v849 = vadd.f32 %v785, %v786
    %v850 = vadd.f32 %v849, %v787
    %v851 = vadd.f32 %v850, %v788
    %v852 = vadd.f32 %v851, %v789
    %v853 = vadd.f32 %v852, %v790
    %v854 = vadd.f32 %v853, %v791
    %v855 = vadd.f32 %v854, %v792
    %v856 = vadd.f32 %v855, %v793
    %v857 = vadd.f32 %v856, %v794
    %v858 = vadd.f32 %v857, %v795
    %v859 = vadd.f32 %v858, %v796
    %v860 = vadd.f32 %v859, %v797
    %v861 = vadd.f32 %v860, %v798
    %v862 = vadd.f32 %v861, %v799
    %v863 = vadd.f32 %v862, %v800
    %v864 = vadd.f32 %v863, %v801
    %v865 = vadd.f32 %v864, %v802
    %v866 = vadd.f32 %v865, %v803
    %v867 = vadd.f32 %v866, %v804
    %v868 = vadd.f32 %v867, %v805
    %v869 = vadd.f32 %v868, %v806
    %v870 = vadd.f32 %v869, %v807
    %v871 = vadd.f32 %v870, %v808
    %v872 = vadd.f32 %v871, %v809
    %v873 = vadd.f32 %v872, %v810
    %v874 = vadd.f32 %v873, %v811
    %v875 = vadd.f32 %v874, %v812
    %v876 = vadd.f32 %v875, %v813
    %v877 = vadd.f32 %v876, %v814
    %v878 = vadd.f32 %v877, %v815
    %v879 = vadd.f32 %v878, %v816
    %v880 = vadd.f32 %v879, %v817
    %v881 = vadd.f32 %v880, %v818
    %v882 = vadd.f32 %v881, %v819
    %v883 = vadd.f32 %v882, %v820
    %v884 = vadd.f32 %v883, %v821
    %v885 = vadd.f32 %v884, %v822
    %v886 = vadd.f32 %v885, %v823
    %v887 = vadd.f32 %v886, %v824
    %v888 = vadd.f32 %v887, %v825
    %v889 = vadd.f32 %v888, %v826
    %v890 = vadd.f32 %v889, %v827
    %v891 = vadd.f32 %v890, %v828
    %v892 = vadd.f32 %v891, %v829
    %v893 = vadd.f32 %v892, %v830
    %v894 = vadd.f32 %v893, %v831
    %v895 = vadd.f32 %v894, %v832
    %v896 = vadd.f32 %v895, %v833
    %v897 = vadd.f32 %v896, %v834
    %v898 = vadd.f32 %v897, %v835
    %v899 = vadd.f32 %v898, %v836
    %v900 = vadd.f32 %v899, %v837
    %v901 = vadd.f32 %v900, %v838
    %v902 = vadd.f32 %v901, %v839
    %v903 = vadd.f32 %v902, %v840
    %v904 = vadd.f32 %v903, %v841
    %v905 = vadd.f32 %v904, %v842
    %v906 = vadd.f32 %v905, %v843
    %v907 = vadd.f32 %v906, %v844
    %v908 = vadd.f32 %v907, %v845
    %v909 = vadd.f32 %v908, %v846
    %v910 = vadd.f32 %v909, %v847
    %v911 = vadd.f32 %v910, %v848
    %v912 = vrot.slane %v911, 4
    %v913 = vadd.f32 %v911, %v912
    %v914 = vrot.slane %v913, 2
    %v915 = vadd.f32 %v913, %v914
    %v916 = vrot.slane %v915, 1
    %v917 = vadd.f32 %v915, %v916
    %918 = vst [vmem:[#allocation6] sm:$0x1] %v917
    // Predicated region
    $region10: #{tpu_custom_call.1} parent=1 // pred_check
      _
    $region11: #{tpu_custom_call.1} parent=1 // pred_check_branch
      %920 = sbr.rel (0) target = $region13
    $region12: #{tpu_custom_call.1} parent=1 // pred_region
      %s922 = ssub.s32 8192, 8192
      %923 = vsyncadd [#allocation3], %s922
      %s924 = sshll.u32 [#allocation2], 4
      %s925 = int_to_ptr.vmem [resolvable:$true] %s924
      %930 = dma.vmem_to_hbm [thread:$0]  %s925, 8192, %s2, [#allocation3], 128, 128, 8
    $region13: #{tpu_custom_call.1} parent=1 // pred_fallthru
      _
    // Predicated region
    $region14: #{tpu_custom_call.1} parent=1 // pred_check
      _
    $region15: #{tpu_custom_call.1} parent=1 // pred_check_branch
      %932 = sbr.rel (0) target = $region17
    $region16: #{tpu_custom_call.1} parent=1 // pred_region
      %s934 = ssub.s32 16, 16
      %935 = vsyncadd [#allocation5], %s934
      %s937 = sshll.u32 [#allocation4], 4
      %s938 = int_to_ptr.vmem [resolvable:$true] %s937
      %940 = dma.vmem_to_hbm [thread:$0]  %s938, 16, %s3, [#allocation5]
    $region17: #{tpu_custom_call.1} parent=1 // pred_fallthru
      _
    // Predicated region
    $region18: #{tpu_custom_call.1} parent=1 // pred_check
      _
    $region19: #{tpu_custom_call.1} parent=1 // pred_check_branch
      %942 = sbr.rel (0) target = $region21
    $region20: #{tpu_custom_call.1} parent=1 // pred_region
      %s944 = ssub.s32 16, 16
      %945 = vsyncadd [#allocation5], %s944
      %s947 = sshll.u32 [#allocation6], 4
      %s948 = int_to_ptr.vmem [resolvable:$true] %s947
      %950 = dma.vmem_to_hbm [thread:$0]  %s948, 16, %s4, [#allocation5]
    $region21: #{tpu_custom_call.1} parent=1 // pred_fallthru
      _
    // Predicated region
    $region22: #{tpu_custom_call.1} parent=1 // pred_check
      _
    $region23: #{tpu_custom_call.1} parent=1 // pred_check_branch
      %952 = sbr.rel (0) target = $region25
    $region24: #{tpu_custom_call.1} parent=1 // pred_region
      %953 = dma.done [#allocation3], 8192
    $region25: #{tpu_custom_call.1} parent=1 // pred_fallthru
      _
    // Predicated region
    $region26: #{tpu_custom_call.1} parent=1 // pred_check
      _
    $region27: #{tpu_custom_call.1} parent=1 // pred_check_branch
      %955 = sbr.rel (0) target = $region29
    $region28: #{tpu_custom_call.1} parent=1 // pred_region
      %956 = dma.done [#allocation5], 16
    $region29: #{tpu_custom_call.1} parent=1 // pred_fallthru
      _
    // Predicated region
    $region30: #{tpu_custom_call.1} parent=1 // pred_check
      _
    $region31: #{tpu_custom_call.1} parent=1 // pred_check_branch
      %958 = sbr.rel (0) target = $region33
    $region32: #{tpu_custom_call.1} parent=1 // pred_region
      %959 = dma.done [#allocation5], 16
    $region33: #{tpu_custom_call.1} parent=1 // pred_fallthru
      _
    %960 = vsyncpa [#allocation3], 1
    %961 = vsyncpa [#allocation5], 1

</llo_original>
